<compile_context>
chip_gen: v6e
topology: v6e:2x2x1
jax: 0.10.0
libtpu: 0.0.40
codegen_flags: <defaults>
</compile_context>

<pallas_src>
import jax
import jax.numpy as jnp
import numpy as np
from jax.experimental import pallas as pl
from jax.experimental.pallas import tpu as pltpu


def _rope_kernel(x_ref, cos_ref, sin_ref, o_ref):
    # x_ref:   (1, TS, D)  native dtype, D = n_h * h_d (lane-dense)
    # cos_ref: (1, TS, D)  f32, per-pair cos duplicated onto both lanes, tiled per head
    # sin_ref: (1, TS, D)  f32, per-pair sin duplicated, sign (-,+,-,+,...), tiled per head
    x = x_ref[...]
    D = x.shape[-1]
    cos = cos_ref[...]
    sin = sin_ref[...]

    # Lane-parity mask from a single-row iota; jnp.where broadcasts it.
    lane = jax.lax.broadcasted_iota(jnp.int32, (1, 1, D), dimension=2)
    is_even = (lane & 1) == 0

    # swap_adjacent(x): lane 2i <-> lane 2i+1, via two lane rotations + select.
    x_next = pltpu.roll(x, D - 1, 2)  # result[j] = x[(j + 1) % D]
    x_prev = pltpu.roll(x, 1, 2)      # result[j] = x[(j - 1) % D]
    x_swap = jnp.where(is_even, x_next, x_prev)

    # out[2i]   = x[2i]   * cos[i] - x[2i+1] * sin[i]
    # out[2i+1] = x[2i+1] * cos[i] + x[2i]   * sin[i]
    out = x * cos + x_swap * sin  # promotes to f32 when x is bf16/f16
    o_ref[...] = out.astype(o_ref.dtype)


class RotaryPositionalEmbeddings:
    """JAX/Pallas port of the PyTorch RotaryPositionalEmbeddings module."""

    def __init__(self, dim: int, max_seq_len: int = 4096, base: int = 10000):
        assert dim % 2 == 0, "RoPE head dim must be even"
        self.dim = dim
        self.base = base
        self.max_seq_len = max_seq_len
        self._rope_init()

    def reset_parameters(self):
        self._rope_init()

    def _rope_init(self):
        half = self.dim // 2
        idx = jnp.arange(0, self.dim, 2, dtype=jnp.float32)[:half]
        theta = 1.0 / (self.base ** (idx / self.dim))            # (half,)
        seq_idx = jnp.arange(self.max_seq_len, dtype=jnp.float32)
        idx_theta = jnp.einsum("i,j->ij", seq_idx, theta)        # (max_seq_len, half)
        cos = jnp.cos(idx_theta)
        sin = jnp.sin(idx_theta)
        # Plain caches (reference / API parity with the PyTorch buffer).
        self.cos_cache = cos                                     # (max_seq_len, half)
        self.sin_cache = sin
        # Kernel-friendly caches: duplicated across each lane pair, sign baked
        # into sin so the kernel needs no deinterleave.
        sign = jnp.where(jnp.arange(self.dim) % 2 == 0, -1.0, 1.0).astype(jnp.float32)
        self.cos2_cache = jnp.repeat(cos, 2, axis=-1)            # (max_seq_len, dim)
        self.sin2_cache = jnp.repeat(sin, 2, axis=-1) * sign     # (max_seq_len, dim)

    def __call__(self, x: jax.Array, *, input_pos=None) -> jax.Array:
        b, s, n_h, h_d = x.shape
        assert h_d == self.dim
        D = n_h * h_d
        assert D % 2 == 0

        # Lane-dense view of x: minor dim is n_h*h_d (contiguous merge, free).
        x_flat = x.reshape(b, s, D)

        # cos/sin in exactly x's flattened layout (tile per head once per call).
        if input_pos is None:
            cos = jnp.tile(self.cos2_cache[:s], (1, n_h))[None]        # (1, s, D)
            sin = jnp.tile(self.sin2_cache[:s], (1, n_h))[None]
            batched_cache = False
        else:
            input_pos = jnp.asarray(input_pos)
            if input_pos.ndim == 1:
                cos = jnp.tile(self.cos2_cache[input_pos], (1, n_h))[None]
                sin = jnp.tile(self.sin2_cache[input_pos], (1, n_h))[None]
                batched_cache = False
            elif input_pos.ndim == 2:
                cos = jnp.tile(self.cos2_cache[input_pos], (1, 1, n_h))  # (b, s, D)
                sin = jnp.tile(self.sin2_cache[input_pos], (1, 1, n_h))
                batched_cache = True
            else:
                raise ValueError("input_pos must be 1-D [s] or 2-D [b, s]")

        # Tile sizing from the real pipelined footprint:
        #   per seq row: x in + x out (double-buffered, native dtype)
        #              + cos + sin    (double-buffered, f32)
        itemsize = jnp.dtype(x.dtype).itemsize
        bytes_per_row = D * (2 * 2 * itemsize + 2 * 2 * 4)
        vmem_limit = 32 * 1024 * 1024                 # safe on v7x's 64 MiB/TC
        budget = vmem_limit // 2                      # headroom for temps/scratch
        tile_s = budget // max(bytes_per_row, 1)
        # ~85% of HBM roofline is reached at ~1-2 MiB blocks; cap there.
        tile_s = min(tile_s, (2 * 1024 * 1024) // max(D * itemsize, 1))
        tile_s = max(8, (tile_s // 8) * 8)
        tile_s = min(tile_s, s)
        num_s_tiles = pl.cdiv(s, tile_s)

        x_index = lambda si, bi: (bi, si, 0)
        if batched_cache:
            cs_index = lambda si, bi: (bi, si, 0)
        else:
            cs_index = lambda si, bi: (0, si, 0)

        out_flat = pl.pallas_call(
            _rope_kernel,
            out_shape=jax.ShapeDtypeStruct((b, s, D), x.dtype),
            grid_spec=pltpu.PrefetchScalarGridSpec(
                num_scalar_prefetch=0,
                # seq tiles outer, batch inner: cos/sin block index is constant
                # across the inner axis, so its DMA is not repeated per batch.
                grid=(num_s_tiles, b),
                in_specs=[
                    pl.BlockSpec((1, tile_s, D), x_index),
                    pl.BlockSpec((1, tile_s, D), cs_index),
                    pl.BlockSpec((1, tile_s, D), cs_index),
                ],
                out_specs=pl.BlockSpec((1, tile_s, D), x_index),
            ),
            compiler_params=pltpu.CompilerParams(
                dimension_semantics=("parallel", "parallel"),
                vmem_limit_bytes=vmem_limit,
            ),
        )(x_flat, cos, sin)

        return out_flat.reshape(b, s, n_h, h_d)


def _rope_reference(x, cos, sin):
    """Pure numpy reference matching the PyTorch forward."""
    b, s, n_h, h_d = x.shape
    xs = np.asarray(x, dtype=np.float32).reshape(b, s, n_h, h_d // 2, 2)
    c = np.asarray(cos, dtype=np.float32)
    sn = np.asarray(sin, dtype=np.float32)
    if c.ndim == 2:
        c, sn = c[None], sn[None]
    c = c[:, :, None, :]   # (b or 1, s, 1, half)
    sn = sn[:, :, None, :]
    r1 = xs[..., 0] * c - xs[..., 1] * sn
    r2 = xs[..., 1] * c + xs[..., 0] * sn
    out = np.stack([r1, r2], axis=-1).reshape(b, s, n_h, h_d)
    return out.astype(np.asarray(x).dtype)


if __name__ == "__main__":
    # Small shapes: batch=2, seq=8, heads=4, head_dim=32
    b, s, n_h, h_d = 2, 8, 4, 32
    key = jax.random.PRNGKey(0)
    x = jax.random.normal(key, (b, s, n_h, h_d), dtype=jnp.float32)

    rope = RotaryPositionalEmbeddings(dim=h_d, max_seq_len=16, base=10000)

    # Default path (positions 0..s-1).
    out = jax.block_until_ready(rope(x))
    ref = _rope_reference(x, rope.cos_cache[:s], rope.sin_cache[:s])
    np.testing.assert_allclose(np.asarray(out), ref, rtol=1e-5, atol=1e-5)

    # 1-D input_pos path.
    pos = jnp.arange(4, 4 + s, dtype=jnp.int32)
    out_p = jax.block_until_ready(rope(x, input_pos=pos))
    ref_p = _rope_reference(x, rope.cos_cache[pos], rope.sin_cache[pos])
    np.testing.assert_allclose(np.asarray(out_p), ref_p, rtol=1e-5, atol=1e-5)

    # 2-D (per-batch) input_pos path.
    pos2 = jnp.stack([jnp.arange(0, s), jnp.arange(8, 8 + s)]).astype(jnp.int32)
    out_p2 = jax.block_until_ready(rope(x, input_pos=pos2))
    ref_p2 = _rope_reference(
        x, np.asarray(rope.cos_cache)[np.asarray(pos2)],
        np.asarray(rope.sin_cache)[np.asarray(pos2)])
    np.testing.assert_allclose(np.asarray(out_p2), ref_p2, rtol=1e-5, atol=1e-5)

    print("KERNEL_OK")
</pallas_src>

<mosaic_0001>
module attributes {stable_mosaic.version = 11 : i64} {
  func.func @_rope_kernel(%arg0: i32, %arg1: i32, %arg2: memref<1x8x128xf32, #tpu.memory_space<vmem>>, %arg3: memref<1x8x128xf32, #tpu.memory_space<vmem>>, %arg4: memref<1x8x128xf32, #tpu.memory_space<vmem>>, %arg5: memref<1x8x128xf32, #tpu.memory_space<vmem>>) attributes {dimension_semantics = [#tpu.dimension_semantics<parallel>, #tpu.dimension_semantics<parallel>], iteration_bounds = array<i64: 1, 2>, scalar_prefetch = 0 : i64, scratch_operands = 0 : i64, tpu.core_type = #tpu.core_type<tc>, window_params = [{transform_indices = @transform_0, window_bounds = array<i64: 1, 8, 128>}, {transform_indices = @transform_1, window_bounds = array<i64: 1, 8, 128>}, {transform_indices = @transform_2, window_bounds = array<i64: 1, 8, 128>}, {transform_indices = @transform_3, window_bounds = array<i64: 1, 8, 128>}]} {
    %c0 = arith.constant 0 : index
    %c0_0 = arith.constant 0 : index
    %c0_1 = arith.constant 0 : index
    %0 = vector.load %arg2[%c0, %c0_0, %c0_1] : memref<1x8x128xf32, #tpu.memory_space<vmem>>, vector<1x8x128xf32>
    %c0_2 = arith.constant 0 : index
    %c0_3 = arith.constant 0 : index
    %c0_4 = arith.constant 0 : index
    %1 = vector.load %arg3[%c0_2, %c0_3, %c0_4] : memref<1x8x128xf32, #tpu.memory_space<vmem>>, vector<1x8x128xf32>
    %c0_5 = arith.constant 0 : index
    %c0_6 = arith.constant 0 : index
    %c0_7 = arith.constant 0 : index
    %2 = vector.load %arg4[%c0_5, %c0_6, %c0_7] : memref<1x8x128xf32, #tpu.memory_space<vmem>>, vector<1x8x128xf32>
    %3 = tpu.iota {dimensions = array<i32: 2>} : vector<1x1x128xi32>
    %c1_i32 = arith.constant 1 : i32
    %4 = vector.broadcast %c1_i32 : i32 to vector<1x1x128xi32>
    %5 = arith.andi %3, %4 : vector<1x1x128xi32>
    %c0_i32 = arith.constant 0 : i32
    %6 = vector.broadcast %c0_i32 : i32 to vector<1x1x128xi32>
    %7 = arith.cmpi eq, %5, %6 : vector<1x1x128xi32>
    %c127_i32 = arith.constant 127 : i32
    %8 = tpu.dynamic_rotate %0 by %c127_i32 dim 2 : vector<1x8x128xf32>, i32 -> vector<1x8x128xf32>
    %c1_i32_8 = arith.constant 1 : i32
    %9 = tpu.dynamic_rotate %0 by %c1_i32_8 dim 2 : vector<1x8x128xf32>, i32 -> vector<1x8x128xf32>
    %10 = vector.shape_cast %7 : vector<1x1x128xi1> to vector<1x1x128xi1>
    %11 = vector.broadcast %10 : vector<1x1x128xi1> to vector<1x8x128xi1>
    %12 = arith.select %11, %8, %9 : vector<1x8x128xi1>, vector<1x8x128xf32>
    %13 = arith.mulf %0, %1 : vector<1x8x128xf32>
    %14 = arith.mulf %12, %2 : vector<1x8x128xf32>
    %15 = arith.addf %13, %14 : vector<1x8x128xf32>
    %c0_9 = arith.constant 0 : index
    %c0_10 = arith.constant 0 : index
    %c0_11 = arith.constant 0 : index
    %16 = vector.load %arg5[%c0_9, %c0_10, %c0_11] : memref<1x8x128xf32, #tpu.memory_space<vmem>>, vector<1x8x128xf32>
    tpu.vector_store %arg5[%c0_9, %c0_10, %c0_11], %15 {strides = array<i32>} : memref<1x8x128xf32, #tpu.memory_space<vmem>>, vector<1x8x128xf32>,
    return
  }
  func.func @transform_0(%arg0: i32, %arg1: i32) -> (i32, i32, i32) {
    %c0_i32 = arith.constant 0 : i32
    %c0_i32_0 = arith.constant 0 : i32
    return %arg1, %arg0, %c0_i32 : i32, i32, i32
  }
  func.func @transform_1(%arg0: i32, %arg1: i32) -> (i32, i32, i32) {
    %c0_i32 = arith.constant 0 : i32
    %c0_i32_0 = arith.constant 0 : i32
    %c0_i32_1 = arith.constant 0 : i32
    return %c0_i32, %arg0, %c0_i32_0 : i32, i32, i32
  }
  func.func @transform_2(%arg0: i32, %arg1: i32) -> (i32, i32, i32) {
    %c0_i32 = arith.constant 0 : i32
    %c0_i32_0 = arith.constant 0 : i32
    %c0_i32_1 = arith.constant 0 : i32
    return %c0_i32, %arg0, %c0_i32_0 : i32, i32, i32
  }
  func.func @transform_3(%arg0: i32, %arg1: i32) -> (i32, i32, i32) {
    %c0_i32 = arith.constant 0 : i32
    %c0_i32_0 = arith.constant 0 : i32
    return %arg1, %arg0, %c0_i32 : i32, i32, i32
  }
}

</mosaic_0001>

<llo_original>
// kernel: tpu_custom_call.1
$region0: #{tpu_custom_call.1}
  #allocation0 [shape = 'u32[]', space=smem, size = 0x4, offset = 0x4, fixed_abs, tag = 'smem constant byte address 0x4 - core index']
  #allocation1 [shape = 'u32[144,128]{1,0:T(1,128)}', space=vmem, size = 0x12000, scoped, tag = 'internal scratch']
  %s0 = inlined_call_operand.hbm [shape: f32[2,8,128], index: 0, kind: input, shape index: {}]
  %s1 = inlined_call_operand.hbm [shape: f32[1,8,128], index: 1, kind: input, shape index: {}]
  %s2 = inlined_call_operand.hbm [shape: f32[1,8,128], index: 2, kind: input, shape index: {}]
  %s3 = inlined_call_operand.hbm [shape: f32[2,8,128], index: 3, kind: output, shape index: {}]
  %s4 = sld [smem:[#allocation0]]
  $region57: #{tpu_custom_call.1} parent=0
    _
  %s6 = ssub.s32 1, %s4
  %s7 = scalar_select 0, %s6, %s4
  $region1: #{tpu_custom_call.1} parent=0
    #allocation2 [shape = 'u8[8192]{0}', space=vmem, size = 0x2000, scoped, tag = 'input window, operand 0']
    #allocation3 [shape = 's32[2]{0}', space=sflag, size = 0x8, scoped, tag = 'scoped memory for tpu_custom_call.1']
    #allocation4 [shape = 's32[2]{0}', space=sflag, size = 0x8, scoped, tag = 'scoped memory for tpu_custom_call.1']
    #allocation5 [shape = 'u8[4096]{0}', space=vmem, size = 0x1000, scoped, tag = 'input window, operand 1, single buffered']
    #allocation6 [shape = 's32[1]{0}', space=sflag, size = 0x4, scoped, tag = 'scoped memory for tpu_custom_call.1']
    #allocation7 [shape = 'u8[4096]{0}', space=vmem, size = 0x1000, scoped, tag = 'input window, operand 2, single buffered']
    #allocation8 [shape = 'u8[8192]{0}', space=vmem, size = 0x2000, scoped, tag = 'output window, operand 0']
    %8 = vsyncpa [#allocation3], 0
    %s9 = scalar_lea.sflag [#allocation3], 1
    %10 = vsyncpa %s9, 0
    %11 = vsyncpa [#allocation6], 0
    %12 = vsyncpa [#allocation4], 0
    %s13 = scalar_lea.sflag [#allocation4], 1
    %14 = vsyncpa %s13, 0
    loop: start=0, step=1, limit=4
    $region2: #{tpu_custom_call.1} parent=1 // loop_pre_header
      _
    $region3: #{tpu_custom_call.1} parent=1 // loop_header
      %s16 = sphi 0, %s20
      %p17 = scmp.ge.s32.totalorder %s16, 4
      %s23 = sphi 0, %s35
      %s24 = sphi 0, %s31
      %s25 = sphi 0, %s23
      %s26 = sphi 0, %s24
      %s27 = sphi 0, %s25
      %s28 = sphi 0, %s26
      %s40 = sphi 0, %s42
      %s43 = sphi 0, %s40
      %s44 = sphi 0, %s43
      %s60 = sphi 0, %s44
      %s66 = sphi 0, %s68
      %s69 = sphi 0, %s66
      %s70 = sphi 0, %s69
      %s86 = sphi 0, %s70
      %s92 = sphi 0, %s94
      %s95 = sphi 0, %s92
      %s96 = sphi 0, %s95
      %s112 = sphi 0, %s96
      %s120 = sphi 0, %s122
      %s123 = sphi 0, %s120
      %s124 = sphi 0, %s123
      %s140 = sphi 0, %s124
    $region4: #{tpu_custom_call.1} parent=1 // loop_header_branch
      %19 = sbr.rel (%p17) target = $region8
    $region5: #{tpu_custom_call.1} parent=1 // loop_body
      %s21 = ssub.s32 %s16, 1
      %s22 = ssub.s32 %s16, 2
      %s29 = sadd.s32 1, %s24
      %p30 = scmp.ge.s32.totalorder %s29, 2
      %s31 = scalar_select %p30, 0, %s29
      %s32 = sadd.s32 1, %s23
      %s33 = scalar_select %p30, %s32, %s23
      %p34 = scmp.ge.s32.totalorder %s33, 1
      %s35 = scalar_select %p34, 0, %s33
      %s36 = ssub.s32 %s24, %s31
      %s37 = ssub.s32 %s23, %s35
      %s38 = sor.u32 %s36, %s37
      %p39 = scmp.eq.s32.totalorder %s38, 0
      %s41 = sadd.s32 %s40, 1
      %s42 = scalar_select %p39, %s40, %s41
      %p45 = pneg %p39
      %p46 = scmp.eq.s32.totalorder %s16, 1
      %p47 = por %p45, %p46
      %p48 = scmp.ne.s32.totalorder %s40, %s43
      %p49 = scmp.eq.s32.totalorder %s16, 0
      %p50 = por %p48, %p49
      %p51 = scmp.ne.s32.totalorder %s40, %s43
      %p52 = scmp.eq.s32.totalorder %s21, 1
      %p53 = por %p51, %p52
      %p54 = scmp.ne.s32.totalorder %s43, %s44
      %p55 = scmp.eq.s32.totalorder %s21, 0
      %p56 = por %p54, %p55
      %p57 = scmp.ne.s32.totalorder %s43, %s44
      %p58 = scmp.eq.s32.totalorder %s22, 1
      %p59 = por %p57, %p58
      %p61 = scmp.ne.s32.totalorder %s44, %s60
      %p62 = scmp.eq.s32.totalorder %s22, 0
      %p63 = por %p61, %p62
      %s64 = ssub.s32 %s23, %s35
      %p65 = scmp.eq.s32.totalorder %s64, 0
      %s67 = sadd.s32 %s66, 1
      %s68 = scalar_select %p65, %s66, %s67
      %p71 = pneg %p65
      %p72 = scmp.eq.s32.totalorder %s16, 1
      %p73 = por %p71, %p72
      %p74 = scmp.ne.s32.totalorder %s66, %s69
      %p75 = scmp.eq.s32.totalorder %s16, 0
      %p76 = por %p74, %p75
      %p77 = scmp.ne.s32.totalorder %s66, %s69
      %p78 = scmp.eq.s32.totalorder %s21, 1
      %p79 = por %p77, %p78
      %p80 = scmp.ne.s32.totalorder %s69, %s70
      %p81 = scmp.eq.s32.totalorder %s21, 0
      %p82 = por %p80, %p81
      %p83 = scmp.ne.s32.totalorder %s69, %s70
      %p84 = scmp.eq.s32.totalorder %s22, 1
      %p85 = por %p83, %p84
      %p87 = scmp.ne.s32.totalorder %s70, %s86
      %p88 = scmp.eq.s32.totalorder %s22, 0
      %p89 = por %p87, %p88
      %s90 = ssub.s32 %s23, %s35
      %p91 = scmp.eq.s32.totalorder %s90, 0
      %s93 = sadd.s32 %s92, 1
      %s94 = scalar_select %p91, %s92, %s93
      %p97 = pneg %p91
      %p98 = scmp.eq.s32.totalorder %s16, 1
      %p99 = por %p97, %p98
      %p100 = scmp.ne.s32.totalorder %s92, %s95
      %p101 = scmp.eq.s32.totalorder %s16, 0
      %p102 = por %p100, %p101
      %p103 = scmp.ne.s32.totalorder %s92, %s95
      %p104 = scmp.eq.s32.totalorder %s21, 1
      %p105 = por %p103, %p104
      %p106 = scmp.ne.s32.totalorder %s95, %s96
      %p107 = scmp.eq.s32.totalorder %s21, 0
      %p108 = por %p106, %p107
      %p109 = scmp.ne.s32.totalorder %s95, %s96
      %p110 = scmp.eq.s32.totalorder %s22, 1
      %p111 = por %p109, %p110
      %p113 = scmp.ne.s32.totalorder %s96, %s112
      %p114 = scmp.eq.s32.totalorder %s22, 0
      %p115 = por %p113, %p114
      %s116 = ssub.s32 %s24, %s31
      %s117 = ssub.s32 %s23, %s35
      %s118 = sor.u32 %s116, %s117
      %p119 = scmp.eq.s32.totalorder %s118, 0
      %s121 = sadd.s32 %s120, 1
      %s122 = scalar_select %p119, %s120, %s121
      %p125 = pneg %p119
      %p126 = scmp.eq.s32.totalorder %s16, 1
      %p127 = por %p125, %p126
      %p128 = scmp.ne.s32.totalorder %s120, %s123
      %p129 = scmp.eq.s32.totalorder %s16, 0
      %p130 = por %p128, %p129
      %p131 = scmp.ne.s32.totalorder %s120, %s123
      %p132 = scmp.eq.s32.totalorder %s21, 1
      %p133 = por %p131, %p132
      %p134 = scmp.ne.s32.totalorder %s123, %s124
      %p135 = scmp.eq.s32.totalorder %s21, 0
      %p136 = por %p134, %p135
      %p137 = scmp.ne.s32.totalorder %s123, %s124
      %p138 = scmp.eq.s32.totalorder %s22, 1
      %p139 = por %p137, %p138
      %p141 = scmp.ne.s32.totalorder %s124, %s140
      %p142 = scmp.eq.s32.totalorder %s22, 0
      %p143 = por %p141, %p142
      %p144 = scmp.le.s32.totalorder 1, %s16
      %p145 = scmp.lt.s32.totalorder %s16, 3
      %p146 = pnand %p144, %p145
      %p147 = pneg %p146
      // Predicated region
      $region9: #{tpu_custom_call.1} parent=5 // pred_check
        _
      $region10: #{tpu_custom_call.1} parent=5 // pred_check_branch
        %149 = sbr.rel (%p146) target = $region12
      $region11: #{tpu_custom_call.1} parent=5 // pred_region
        %s150 = ssub.s32 %s16, 1
        // Predicated region
        $region13: #{tpu_custom_call.1} parent=11 // pred_check
          %p151 = pneg %p82
        $region14: #{tpu_custom_call.1} parent=11 // pred_check_branch
          %153 = sbr.rel (%p151) target = $region16
        $region15: #{tpu_custom_call.1} parent=11 // pred_region
          %s155 = ssub.s32 128, 128
          %156 = vsyncadd [#allocation6], %s155
          %s157 = smul.addr %s25, 128
          %s158 = scalar_lea.hbm %s1, %s157
          %s160 = sshll.u32 [#allocation5], 4
          %s161 = int_to_ptr.vmem [resolvable:$true] %s160
          %163 = dma.hbm_to_vmem [thread:$0]  %s158, 128, %s161, [#allocation6]
        $region16: #{tpu_custom_call.1} parent=11 // pred_fallthru
          _
        // Predicated region
        $region17: #{tpu_custom_call.1} parent=11 // pred_check
          %p164 = pneg %p108
        $region18: #{tpu_custom_call.1} parent=11 // pred_check_branch
          %166 = sbr.rel (%p164) target = $region20
        $region19: #{tpu_custom_call.1} parent=11 // pred_region
          %s168 = ssub.s32 128, 128
          %169 = vsyncadd [#allocation6], %s168
          %s170 = smul.addr %s25, 128
          %s171 = scalar_lea.hbm %s2, %s170
          %s173 = sshll.u32 [#allocation7], 4
          %s174 = int_to_ptr.vmem [resolvable:$true] %s173
          %176 = dma.hbm_to_vmem [thread:$0]  %s171, 128, %s174, [#allocation6]
        $region20: #{tpu_custom_call.1} parent=11 // pred_fallthru
          _
      $region12: #{tpu_custom_call.1} parent=5 // pred_fallthru
        _
      %p177 = scmp.lt.s32.totalorder %s16, 2
      // Predicated region
      $region21: #{tpu_custom_call.1} parent=5 // pred_check
        %p178 = pneg %p177
      $region22: #{tpu_custom_call.1} parent=5 // pred_check_branch
        %180 = sbr.rel (%p178) target = $region24
      $region23: #{tpu_custom_call.1} parent=5 // pred_region
        // Predicated region
        $region25: #{tpu_custom_call.1} parent=23 // pred_check
          %p181 = pneg %p50
        $region26: #{tpu_custom_call.1} parent=23 // pred_check_branch
          %183 = sbr.rel (%p181) target = $region28
        $region27: #{tpu_custom_call.1} parent=23 // pred_region
          %s184 = sand.u32 %s40, 1
          %s185 = scalar_lea.sflag [#allocation3], %s184
          %s186 = sand.u32 %s40, 1
          %s187 = smul.addr %s186, 8
          %s188 = scalar_lea.vmem [#allocation2], %s187
          %s190 = ssub.s32 128, 128
          %191 = vsyncadd %s185, %s190
          %s192 = sadd.s32 %s23, %s24
          %s193 = smul.addr %s192, 128
          %s194 = scalar_lea.hbm %s0, %s193
          %s196 = sshll.u32 %s188, 4
          %s197 = int_to_ptr.vmem [resolvable:$true] %s196
          %199 = dma.hbm_to_vmem [thread:$0]  %s194, 128, %s197, %s185
        $region28: #{tpu_custom_call.1} parent=23 // pred_fallthru
          _
      $region24: #{tpu_custom_call.1} parent=5 // pred_fallthru
        _
      %p200 = scmp.le.s32.totalorder 1, %s16
      %p201 = scmp.lt.s32.totalorder %s16, 3
      %p202 = pnand %p200, %p201
      %p203 = pneg %p202
      // Predicated region
      $region29: #{tpu_custom_call.1} parent=5 // pred_check
        _
      $region30: #{tpu_custom_call.1} parent=5 // pred_check_branch
        %205 = sbr.rel (%p202) target = $region32
      $region31: #{tpu_custom_call.1} parent=5 // pred_region
        %s206 = ssub.s32 %s16, 1
        %s207 = sand.u32 %s43, 1
        %s208 = scalar_lea.sflag [#allocation3], %s207
        %s209 = sand.u32 %s43, 1
        %s210 = smul.addr %s209, 8
        %s211 = scalar_lea.vmem [#allocation2], %s210
        // Predicated region
        $region33: #{tpu_custom_call.1} parent=31 // pred_check
          %p212 = pneg %p56
        $region34: #{tpu_custom_call.1} parent=31 // pred_check_branch
          %214 = sbr.rel (%p212) target = $region36
        $region35: #{tpu_custom_call.1} parent=31 // pred_region
          %215 = dma.done %s208, 128
        $region36: #{tpu_custom_call.1} parent=31 // pred_fallthru
          _
        // Predicated region
        $region37: #{tpu_custom_call.1} parent=31 // pred_check
          %p216 = pneg %p82
        $region38: #{tpu_custom_call.1} parent=31 // pred_check_branch
          %218 = sbr.rel (%p216) target = $region40
        $region39: #{tpu_custom_call.1} parent=31 // pred_region
          %219 = dma.done [#allocation6], 128
        $region40: #{tpu_custom_call.1} parent=31 // pred_fallthru
          _
        // Predicated region
        $region41: #{tpu_custom_call.1} parent=31 // pred_check
          %p220 = pneg %p108
        $region42: #{tpu_custom_call.1} parent=31 // pred_check_branch
          %222 = sbr.rel (%p220) target = $region44
        $region43: #{tpu_custom_call.1} parent=31 // pred_region
          %223 = dma.done [#allocation6], 128
        $region44: #{tpu_custom_call.1} parent=31 // pred_fallthru
          _
        %s224 = sand.u32 %s43, 1
        %s225 = scalar_lea.sflag [#allocation3], %s224
        %s226 = sand.u32 %s43, 1
        %s227 = smul.addr %s226, 8
        %s228 = scalar_lea.vmem [#allocation2], %s227
        %p229 = pneg %p56
        %p230 = pneg %p53
        %p231 = pneg %p82
        %p232 = pneg %p79
        %p233 = pneg %p108
        %p234 = pneg %p105
        %p235 = pneg %p136
        %p236 = pneg %p133
        %s237 = sand.u32 %s123, 1
        %s238 = scalar_lea.sflag [#allocation4], %s237
        %s239 = sand.u32 %s123, 1
        %s240 = smul.addr %s239, 8
        %s241 = scalar_lea.vmem [#allocation8], %s240
        %v242 = vld [vmem:[%s211] sm:$0xff]
        %v243 = vld [vmem:[#allocation5] sm:$0xff]
        %v244 = vld [vmem:[#allocation7] sm:$0xff]
        %v245 = vlaneseq
        %v246 = vand.u32 %v245, 127
        %v247 = vand.u32 %v246, 1
        %vm248 = vcmp.eq.s32.totalorder %v247, 0
        %249 = vrot.lane.b32.xlu0 %v242, 127
        %v250 = vpop.permute.xlu0 %249
        %251 = vrot.lane.b32.xlu0 %v242, 1
        %v252 = vpop.permute.xlu0 %251
        %v253 = vsel %vm248, 1, 0
        %vm254 = vcmp.eq.s32.totalorder %v253, 1
        %v255 = vsel %vm254, %v250, %v252
        %v256 = vmul.f32 %v242, %v243
        %v257 = vmul.f32 %v255, %v244
        %v258 = vadd.f32 %v256, %v257
        %259 = vst [vmem:[%s241] sm:$0xff] %v258
        %s260 = sand.u32 %s123, 1
        %s261 = scalar_lea.sflag [#allocation4], %s260
        %s262 = sand.u32 %s123, 1
        %s263 = smul.addr %s262, 8
        %s264 = scalar_lea.vmem [#allocation8], %s263
        // Predicated region
        $region45: #{tpu_custom_call.1} parent=31 // pred_check
          %p265 = pneg %p133
        $region46: #{tpu_custom_call.1} parent=31 // pred_check_branch
          %267 = sbr.rel (%p265) target = $region48
        $region47: #{tpu_custom_call.1} parent=31 // pred_region
          %s269 = ssub.s32 128, 128
          %270 = vsyncadd %s261, %s269
          %s271 = sadd.s32 %s25, %s26
          %s272 = smul.addr %s271, 128
          %s273 = scalar_lea.hbm %s3, %s272
          %s275 = sshll.u32 %s264, 4
          %s276 = int_to_ptr.vmem [resolvable:$true] %s275
          %278 = dma.vmem_to_hbm [thread:$0]  %s276, 128, %s273, %s261
        $region48: #{tpu_custom_call.1} parent=31 // pred_fallthru
          _
      $region32: #{tpu_custom_call.1} parent=5 // pred_fallthru
        _
      %p279 = scmp.le.s32.totalorder 2, %s16
      // Predicated region
      $region49: #{tpu_custom_call.1} parent=5 // pred_check
        %p280 = pneg %p279
      $region50: #{tpu_custom_call.1} parent=5 // pred_check_branch
        %282 = sbr.rel (%p280) target = $region52
      $region51: #{tpu_custom_call.1} parent=5 // pred_region
        %s283 = ssub.s32 %s16, 2
        // Predicated region
        $region53: #{tpu_custom_call.1} parent=51 // pred_check
          %p284 = pneg %p139
        $region54: #{tpu_custom_call.1} parent=51 // pred_check_branch
          %286 = sbr.rel (%p284) target = $region56
        $region55: #{tpu_custom_call.1} parent=51 // pred_region
          %s287 = sand.u32 %s124, 1
          %s288 = scalar_lea.sflag [#allocation4], %s287
          %s289 = sand.u32 %s124, 1
          %s290 = smul.addr %s289, 8
          %s291 = scalar_lea.vmem [#allocation8], %s290
          %292 = dma.done %s288, 128
        $region56: #{tpu_custom_call.1} parent=51 // pred_fallthru
          _
      $region52: #{tpu_custom_call.1} parent=5 // pred_fallthru
        _
    $region6: #{tpu_custom_call.1} parent=1 // loop_footer
      %s20 = sadd.s32 1, %s16
    $region7: #{tpu_custom_call.1} parent=1 // loop_footer_branch
      %15 = sbr.rel target = $region3
    $region8: #{tpu_custom_call.1} parent=1 // loop_exit
      _
    %293 = vsyncpa [#allocation3], 1
    %s294 = scalar_lea.sflag [#allocation3], 1
    %295 = vsyncpa %s294, 1
    %296 = vsyncpa [#allocation6], 1
    %297 = vsyncpa [#allocation4], 1
    %s298 = scalar_lea.sflag [#allocation4], 1
    %299 = vsyncpa %s298, 1

</llo_original>
